<compile_context>
chip_gen: v7x
topology: tpu7x:2x2x1
jax: 0.10.0
libtpu: 0.0.40
codegen_flags: <defaults>
</compile_context>

<pallas_src>
import jax
import jax.numpy as jnp
from jax.experimental import pallas as pl
from jax.experimental.pallas import tpu as pltpu


LATENT = 32          # latent_dimension
OUT_FEATS = 2        # out_node_features
OUT_PAD = 8          # decoder-2 rows padded to one full sublane group
N_NODES = 256        # number of graph nodes (LSTM "batch")


def _lstm_decoder_kernel(x_ref, h0_ref, c0_ref, wg_ref, bias_ref,
                         d1w_ref, d2w_ref, y_ref, hn_ref, cn_ref,
                         xh_scratch):
    L = LATENT
    # Transposed layout: (features, nodes).  Nodes on lanes -> lane-dense
    # VPU/EUP work and lane-dense unmasked output stores.
    x = x_ref[...]                          # (L,  N)
    h0 = h0_ref[...]                        # (L,  N)
    c0 = c0_ref[...]                        # (L,  N)

    bias = bias_ref[...]                    # (4L + L + OUT_PAD, 1) packed column
    bg = bias[0:4 * L, :]                   # (4L, 1)  LSTM gate bias (b_ih+b_hh)
    d1b = bias[4 * L:5 * L, :]              # (L,  1)  decoder-1 bias
    d2b = bias[5 * L:5 * L + OUT_PAD, :]    # (8,  1)  decoder-2 bias (zero-padded)

    # Assemble xh = [x; h0] in VMEM scratch (sublane-aligned stores) so the
    # LSTM gates are one fused K = 2L = 64 MXU matmul.
    xh_scratch[0:L, :] = x
    xh_scratch[L:2 * L, :] = h0

    # One LSTM step (seq_len == 1).  PyTorch gate order: i, f, g, o.
    gates = (jnp.dot(wg_ref[...], xh_scratch[...],
                     preferred_element_type=jnp.float32)
             + bg)                                              # (4L, N)

    # sigmoid(x) = 0.5 * (tanh(0.5 x) + 1): one EUP push instead of two.
    def sig(v):
        return 0.5 * (jnp.tanh(0.5 * v) + 1.0)

    i_g = sig(gates[0 * L:1 * L, :])
    f_g = sig(gates[1 * L:2 * L, :])
    g_g = jnp.tanh(gates[2 * L:3 * L, :])
    o_g = sig(gates[3 * L:4 * L, :])

    c_new = f_g * c0 + i_g * g_g                                # (L, N)
    h_new = o_g * jnp.tanh(c_new)                               # (L, N)

    # MLP decoder (transposed): Linear -> LeakyReLU(0.01) -> Linear
    z = (jnp.dot(d1w_ref[...], h_new, preferred_element_type=jnp.float32)
         + d1b)                                                 # (L, N)
    z = jnp.where(z >= 0, z, 0.01 * z)
    y = (jnp.dot(d2w_ref[...], z, preferred_element_type=jnp.float32)
         + d2b)                                                 # (OUT_PAD, N)

    y_ref[...] = y                                              # lane-dense stores
    hn_ref[...] = h_new
    cn_ref[...] = c_new


_VMEM_SPEC = pl.BlockSpec(memory_space=pltpu.MemorySpace.VMEM)


def prepare_params(params):
    """One-time parameter repacking (hoisted out of the per-call path)."""
    L = LATENT
    # Fused LSTM gate weight: W = [w_ih; w_hh] transposed to (4L, 2L).
    wg_t = jnp.concatenate([params["w_ih"], params["w_hh"]], axis=0).T
    bg = params["b_lstm"].reshape(4 * L, 1)
    d1b = params["d1_b"].reshape(L, 1)
    # Decoder-2 padded to a full sublane group (rows 2..7 are zero).
    d2w_pad = jnp.zeros((OUT_PAD, L), jnp.float32).at[:OUT_FEATS, :].set(
        params["d2_w"].T)
    d2b_pad = jnp.zeros((OUT_PAD, 1), jnp.float32).at[:OUT_FEATS, :].set(
        params["d2_b"].reshape(OUT_FEATS, 1))
    # All biases packed into a single column operand, sliced in-kernel at
    # sublane-aligned offsets (0, 128, 160).
    bias_col = jnp.concatenate([bg, d1b, d2b_pad], axis=0)      # (4L+L+8, 1)
    d1w_t = params["d1_w"].T                                    # (L, L)
    return {"wg_t": wg_t, "bias_col": bias_col, "d1w_t": d1w_t,
            "d2w_pad_t": d2w_pad}


def lstm_decoder_step_t(x_t, h0_t, c0_t, prepped):
    """Core fused LSTM + MLP-decoder step, fully in (features, nodes) layout.

    x_t, h0_t, c0_t: (L, N).  Returns (y_pad_t (OUT_PAD, N), h_n_t (L, N),
    c_n_t (L, N)); a recurrent caller can feed h_n_t/c_n_t straight back in
    without any transposes.
    """
    L = LATENT
    N = x_t.shape[1]
    return pl.pallas_call(
        _lstm_decoder_kernel,
        out_shape=(
            jax.ShapeDtypeStruct((OUT_PAD, N), jnp.float32),
            jax.ShapeDtypeStruct((L, N), jnp.float32),
            jax.ShapeDtypeStruct((L, N), jnp.float32),
        ),
        in_specs=[_VMEM_SPEC] * 7,
        out_specs=(_VMEM_SPEC, _VMEM_SPEC, _VMEM_SPEC),
        scratch_shapes=[pltpu.VMEM((2 * L, N), jnp.float32)],
    )(x_t, h0_t, c0_t,
      prepped["wg_t"], prepped["bias_col"], prepped["d1w_t"],
      prepped["d2w_pad_t"])


def lstm_homo_gnn_forward(node_latents, h_0, c_0, prepped):
    """PyTorch-shaped adapter: node_latents (N, L); h_0, c_0 (1, N, L).

    Returns (node_features (N, 1, OUT_FEATS), h_n (1, N, L), c_n (1, N, L)),
    matching the mlp_decoder=True branch.  For repeated timesteps, call
    lstm_decoder_step_t directly and keep the state transposed.
    """
    N, L = node_latents.shape
    assert L == LATENT
    x_t = node_latents.T
    h0_t = h_0.reshape(N, L).T
    c0_t = c_0.reshape(N, L).T
    y_pad_t, hn_t, cn_t = lstm_decoder_step_t(x_t, h0_t, c0_t, prepped)
    y = y_pad_t[:OUT_FEATS, :].T.reshape(N, 1, OUT_FEATS)
    return y, hn_t.T.reshape(1, N, L), cn_t.T.reshape(1, N, L)


def _reference(node_latents, h_0, c_0, params):
    """Plain-JAX reference of the same math, for verification."""
    L = LATENT
    x = node_latents
    h0 = h_0.reshape(-1, L)
    c0 = c_0.reshape(-1, L)
    gates = x @ params["w_ih"] + h0 @ params["w_hh"] + params["b_lstm"][None, :]
    i_g = jax.nn.sigmoid(gates[:, 0 * L:1 * L])
    f_g = jax.nn.sigmoid(gates[:, 1 * L:2 * L])
    g_g = jnp.tanh(gates[:, 2 * L:3 * L])
    o_g = jax.nn.sigmoid(gates[:, 3 * L:4 * L])
    c_new = f_g * c0 + i_g * g_g
    h_new = o_g * jnp.tanh(c_new)
    z = h_new @ params["d1_w"] + params["d1_b"][None, :]
    z = jnp.where(z >= 0, z, 0.01 * z)
    y = z @ params["d2_w"] + params["d2_b"][None, :]
    return y, h_new, c_new


def init_params(key):
    """Deterministic parameter init (PyTorch-style uniform ranges)."""
    L = LATENT
    ks = jax.random.split(key, 8)
    bound = 1.0 / jnp.sqrt(L)
    u = lambda k, shape: jax.random.uniform(k, shape, jnp.float32, -bound, bound)
    # LSTM weights stored pre-transposed as (in, 4H) for x @ W.
    # (Real nn.LSTM checkpoints store (4H, in): transpose when loading.)
    w_ih = u(ks[0], (L, 4 * L))
    w_hh = u(ks[1], (L, 4 * L))
    b_ih = u(ks[2], (4 * L,))
    b_hh = u(ks[3], (4 * L,))
    d1_w = u(ks[4], (L, L))
    d1_b = u(ks[5], (L,))
    d2_w = u(ks[6], (L, OUT_FEATS))
    d2_b = u(ks[7], (OUT_FEATS,))
    return {
        "w_ih": w_ih, "w_hh": w_hh, "b_lstm": b_ih + b_hh,
        "d1_w": d1_w, "d1_b": d1_b, "d2_w": d2_w, "d2_b": d2_b,
    }


if __name__ == "__main__":
    key = jax.random.PRNGKey(0)
    k_in, k_h, k_c, k_p = jax.random.split(key, 4)

    # Stand-in for GNNBase + predict_velocity output: latent node features.
    node_latents = jax.random.normal(k_in, (N_NODES, LATENT), jnp.float32)
    h_0 = jax.random.normal(k_h, (1, N_NODES, LATENT), jnp.float32)
    c_0 = jax.random.normal(k_c, (1, N_NODES, LATENT), jnp.float32)
    params = init_params(k_p)
    prepped = prepare_params(params)        # one-time weight repacking

    y, h_n, c_n = lstm_homo_gnn_forward(node_latents, h_0, c_0, prepped)
    jax.block_until_ready((y, h_n, c_n))

    y_ref, h_ref, c_ref = _reference(node_latents, h_0, c_0, params)
    assert jnp.allclose(y.reshape(N_NODES, OUT_FEATS), y_ref, atol=1e-4, rtol=1e-4)
    assert jnp.allclose(h_n.reshape(N_NODES, LATENT), h_ref, atol=1e-4, rtol=1e-4)
    assert jnp.allclose(c_n.reshape(N_NODES, LATENT), c_ref, atol=1e-4, rtol=1e-4)

    print("KERNEL_OK")
</pallas_src>

<mosaic_0001>
module attributes {stable_mosaic.version = 11 : i64} {
  func.func @_lstm_decoder_kernel(%arg0: memref<32x256xf32, #tpu.memory_space<vmem>>, %arg1: memref<32x256xf32, #tpu.memory_space<vmem>>, %arg2: memref<32x256xf32, #tpu.memory_space<vmem>>, %arg3: memref<128x64xf32, #tpu.memory_space<vmem>>, %arg4: memref<168x1xf32, #tpu.memory_space<vmem>>, %arg5: memref<32x32xf32, #tpu.memory_space<vmem>>, %arg6: memref<8x32xf32, #tpu.memory_space<vmem>>, %arg7: memref<8x256xf32, #tpu.memory_space<vmem>>, %arg8: memref<32x256xf32, #tpu.memory_space<vmem>>, %arg9: memref<32x256xf32, #tpu.memory_space<vmem>>, %arg10: memref<64x256xf32, #tpu.memory_space<vmem>>) attributes {dimension_semantics = [], scalar_prefetch = 0 : i64, scratch_operands = 1 : i64, tpu.core_type = #tpu.core_type<tc>} {
    %c0 = arith.constant 0 : index
    %c0_0 = arith.constant 0 : index
    %0 = vector.load %arg0[%c0, %c0_0] : memref<32x256xf32, #tpu.memory_space<vmem>>, vector<32x256xf32>
    %c0_1 = arith.constant 0 : index
    %c0_2 = arith.constant 0 : index
    %1 = vector.load %arg1[%c0_1, %c0_2] : memref<32x256xf32, #tpu.memory_space<vmem>>, vector<32x256xf32>
    %c0_3 = arith.constant 0 : index
    %c0_4 = arith.constant 0 : index
    %2 = vector.load %arg2[%c0_3, %c0_4] : memref<32x256xf32, #tpu.memory_space<vmem>>, vector<32x256xf32>
    %c0_5 = arith.constant 0 : index
    %c0_6 = arith.constant 0 : index
    %3 = vector.load %arg4[%c0_5, %c0_6] : memref<168x1xf32, #tpu.memory_space<vmem>>, vector<168x1xf32>
    %4 = vector.extract_strided_slice %3 {offsets = [0, 0], sizes = [128, 1], strides = [1, 1]} : vector<168x1xf32> to vector<128x1xf32>
    %5 = vector.extract_strided_slice %3 {offsets = [128, 0], sizes = [32, 1], strides = [1, 1]} : vector<168x1xf32> to vector<32x1xf32>
    %6 = vector.extract_strided_slice %3 {offsets = [160, 0], sizes = [8, 1], strides = [1, 1]} : vector<168x1xf32> to vector<8x1xf32>
    %c0_7 = arith.constant 0 : index
    %c0_8 = arith.constant 0 : index
    %7 = vector.load %arg10[%c0_7, %c0_8] : memref<64x256xf32, #tpu.memory_space<vmem>>, vector<32x256xf32>
    tpu.vector_store %arg10[%c0_7, %c0_8], %0 {strides = array<i32>} : memref<64x256xf32, #tpu.memory_space<vmem>>, vector<32x256xf32>,
    %c32 = arith.constant 32 : index
    %c0_9 = arith.constant 0 : index
    %8 = vector.load %arg10[%c32, %c0_9] : memref<64x256xf32, #tpu.memory_space<vmem>>, vector<32x256xf32>
    tpu.vector_store %arg10[%c32, %c0_9], %1 {strides = array<i32>} : memref<64x256xf32, #tpu.memory_space<vmem>>, vector<32x256xf32>,
    %c0_10 = arith.constant 0 : index
    %c0_11 = arith.constant 0 : index
    %9 = vector.load %arg3[%c0_10, %c0_11] : memref<128x64xf32, #tpu.memory_space<vmem>>, vector<128x64xf32>
    %c0_12 = arith.constant 0 : index
    %c0_13 = arith.constant 0 : index
    %10 = vector.load %arg10[%c0_12, %c0_13] : memref<64x256xf32, #tpu.memory_space<vmem>>, vector<64x256xf32>
    %cst = arith.constant dense<0.000000e+00> : vector<128x256xf32>
    %11 = tpu.matmul %9, %10, %cst {dimension_numbers = #tpu.dot_dimension_numbers<[1], [0], [0], [1], [0, 0, 1, 1], [], []>} : vector<128x64xf32>, vector<64x256xf32>, vector<128x256xf32> -> vector<128x256xf32>
    %12 = vector.broadcast %4 : vector<128x1xf32> to vector<128x256xf32>
    %13 = arith.addf %11, %12 : vector<128x256xf32>
    %14 = vector.extract_strided_slice %13 {offsets = [0, 0], sizes = [32, 256], strides = [1, 1]} : vector<128x256xf32> to vector<32x256xf32>
    %cst_14 = arith.constant 5.000000e-01 : f32
    %15 = vector.broadcast %cst_14 : f32 to vector<32x256xf32>
    %16 = arith.mulf %15, %14 : vector<32x256xf32>
    %17 = math.tanh %16 : vector<32x256xf32>
    %cst_15 = arith.constant 1.000000e+00 : f32
    %18 = vector.broadcast %cst_15 : f32 to vector<32x256xf32>
    %19 = arith.addf %17, %18 : vector<32x256xf32>
    %cst_16 = arith.constant 5.000000e-01 : f32
    %20 = vector.broadcast %cst_16 : f32 to vector<32x256xf32>
    %21 = arith.mulf %20, %19 : vector<32x256xf32>
    %22 = vector.extract_strided_slice %13 {offsets = [32, 0], sizes = [32, 256], strides = [1, 1]} : vector<128x256xf32> to vector<32x256xf32>
    %cst_17 = arith.constant 5.000000e-01 : f32
    %23 = vector.broadcast %cst_17 : f32 to vector<32x256xf32>
    %24 = arith.mulf %23, %22 : vector<32x256xf32>
    %25 = math.tanh %24 : vector<32x256xf32>
    %cst_18 = arith.constant 1.000000e+00 : f32
    %26 = vector.broadcast %cst_18 : f32 to vector<32x256xf32>
    %27 = arith.addf %25, %26 : vector<32x256xf32>
    %cst_19 = arith.constant 5.000000e-01 : f32
    %28 = vector.broadcast %cst_19 : f32 to vector<32x256xf32>
    %29 = arith.mulf %28, %27 : vector<32x256xf32>
    %30 = vector.extract_strided_slice %13 {offsets = [64, 0], sizes = [32, 256], strides = [1, 1]} : vector<128x256xf32> to vector<32x256xf32>
    %31 = math.tanh %30 : vector<32x256xf32>
    %32 = vector.extract_strided_slice %13 {offsets = [96, 0], sizes = [32, 256], strides = [1, 1]} : vector<128x256xf32> to vector<32x256xf32>
    %cst_20 = arith.constant 5.000000e-01 : f32
    %33 = vector.broadcast %cst_20 : f32 to vector<32x256xf32>
    %34 = arith.mulf %33, %32 : vector<32x256xf32>
    %35 = math.tanh %34 : vector<32x256xf32>
    %cst_21 = arith.constant 1.000000e+00 : f32
    %36 = vector.broadcast %cst_21 : f32 to vector<32x256xf32>
    %37 = arith.addf %35, %36 : vector<32x256xf32>
    %cst_22 = arith.constant 5.000000e-01 : f32
    %38 = vector.broadcast %cst_22 : f32 to vector<32x256xf32>
    %39 = arith.mulf %38, %37 : vector<32x256xf32>
    %40 = arith.mulf %29, %2 : vector<32x256xf32>
    %41 = arith.mulf %21, %31 : vector<32x256xf32>
    %42 = arith.addf %40, %41 : vector<32x256xf32>
    %43 = math.tanh %42 : vector<32x256xf32>
    %44 = arith.mulf %39, %43 : vector<32x256xf32>
    %c0_23 = arith.constant 0 : index
    %c0_24 = arith.constant 0 : index
    %45 = vector.load %arg5[%c0_23, %c0_24] : memref<32x32xf32, #tpu.memory_space<vmem>>, vector<32x32xf32>
    %cst_25 = arith.constant dense<0.000000e+00> : vector<32x256xf32>
    %46 = tpu.matmul %45, %44, %cst_25 {dimension_numbers = #tpu.dot_dimension_numbers<[1], [0], [0], [1], [0, 0, 1, 1], [], []>} : vector<32x32xf32>, vector<32x256xf32>, vector<32x256xf32> -> vector<32x256xf32>
    %47 = vector.broadcast %5 : vector<32x1xf32> to vector<32x256xf32>
    %48 = arith.addf %46, %47 : vector<32x256xf32>
    %cst_26 = arith.constant 0.000000e+00 : f32
    %49 = vector.broadcast %cst_26 : f32 to vector<32x256xf32>
    %50 = arith.cmpf oge, %48, %49 : vector<32x256xf32>
    %cst_27 = arith.constant 0.00999999977 : f32
    %51 = vector.broadcast %cst_27 : f32 to vector<32x256xf32>
    %52 = arith.mulf %51, %48 : vector<32x256xf32>
    %53 = arith.select %50, %48, %52 : vector<32x256xi1>, vector<32x256xf32>
    %c0_28 = arith.constant 0 : index
    %c0_29 = arith.constant 0 : index
    %54 = vector.load %arg6[%c0_28, %c0_29] : memref<8x32xf32, #tpu.memory_space<vmem>>, vector<8x32xf32>
    %cst_30 = arith.constant dense<0.000000e+00> : vector<8x256xf32>
    %55 = tpu.matmul %54, %53, %cst_30 {dimension_numbers = #tpu.dot_dimension_numbers<[1], [0], [0], [1], [0, 0, 1, 1], [], []>} : vector<8x32xf32>, vector<32x256xf32>, vector<8x256xf32> -> vector<8x256xf32>
    %56 = vector.broadcast %6 : vector<8x1xf32> to vector<8x256xf32>
    %57 = arith.addf %55, %56 : vector<8x256xf32>
    %c0_31 = arith.constant 0 : index
    %c0_32 = arith.constant 0 : index
    %58 = vector.load %arg7[%c0_31, %c0_32] : memref<8x256xf32, #tpu.memory_space<vmem>>, vector<8x256xf32>
    tpu.vector_store %arg7[%c0_31, %c0_32], %57 {strides = array<i32>} : memref<8x256xf32, #tpu.memory_space<vmem>>, vector<8x256xf32>,
    %c0_33 = arith.constant 0 : index
    %c0_34 = arith.constant 0 : index
    %59 = vector.load %arg8[%c0_33, %c0_34] : memref<32x256xf32, #tpu.memory_space<vmem>>, vector<32x256xf32>
    tpu.vector_store %arg8[%c0_33, %c0_34], %44 {strides = array<i32>} : memref<32x256xf32, #tpu.memory_space<vmem>>, vector<32x256xf32>,
    %c0_35 = arith.constant 0 : index
    %c0_36 = arith.constant 0 : index
    %60 = vector.load %arg9[%c0_35, %c0_36] : memref<32x256xf32, #tpu.memory_space<vmem>>, vector<32x256xf32>
    tpu.vector_store %arg9[%c0_35, %c0_36], %42 {strides = array<i32>} : memref<32x256xf32, #tpu.memory_space<vmem>>, vector<32x256xf32>,
    return
  }
}

</mosaic_0001>

<llo_original>
// kernel: tpu_custom_call.1
$region0: #{tpu_custom_call.1}
  #allocation0 [shape = 'u32[]', space=smem, size = 0x4, offset = 0x4, fixed_abs, tag = 'smem constant byte address 0x4 - core index']
  #allocation1 [shape = 'u32[144,128]{1,0:T(1,128)}', space=vmem, size = 0x12000, scoped, tag = 'internal scratch']
  #allocation2 [shape = 'f32[64,256]{1,0:T(8,128)}', space=vmem, size = 0x10000, scoped, tag = 'scratch operand']
  %s0 = inlined_call_operand.vmem [shape: f32[32,256], index: 0, kind: input, shape index: {}]
  %s1 = inlined_call_operand.vmem [shape: f32[32,256], index: 1, kind: input, shape index: {}]
  %s2 = inlined_call_operand.vmem [shape: f32[32,256], index: 2, kind: input, shape index: {}]
  %s3 = inlined_call_operand.vmem [shape: f32[128,64], index: 3, kind: input, shape index: {}]
  %s4 = inlined_call_operand.vmem [shape: f32[168,1], index: 4, kind: input, shape index: {}]
  %s5 = inlined_call_operand.vmem [shape: f32[32,32], index: 5, kind: input, shape index: {}]
  %s6 = inlined_call_operand.vmem [shape: f32[8,32], index: 6, kind: input, shape index: {}]
  %s7 = inlined_call_operand.hbm [shape: f32[8,256], index: 7, kind: output, shape index: {0}]
  %s8 = inlined_call_operand.hbm [shape: f32[32,256], index: 8, kind: output, shape index: {1}]
  %s9 = inlined_call_operand.hbm [shape: f32[32,256], index: 9, kind: output, shape index: {2}]
  %10 = xla_tuple %s7, %s8, %s9
  %s11 = sld [smem:[#allocation0]]
  $region54: #{tpu_custom_call.1} parent=0
    _
  %s13 = ssub.s32 1, %s11
  %s14 = scalar_select 0, %s13, %s11
  $region1: #{tpu_custom_call.1} parent=0
    #allocation3 [shape = 'u8[8192]{0}', space=vmem, size = 0x2000, scoped, tag = 'output window, operand 0, single buffered']
    #allocation4 [shape = 's32[1]{0}', space=sflag, size = 0x4, scoped, tag = 'scoped memory for tpu_custom_call.1']
    #allocation5 [shape = 'u8[32768]{0}', space=vmem, size = 0x8000, scoped, tag = 'output window, operand 1, single buffered']
    #allocation6 [shape = 's32[1]{0}', space=sflag, size = 0x4, scoped, tag = 'scoped memory for tpu_custom_call.1']
    #allocation7 [shape = 'u8[32768]{0}', space=vmem, size = 0x8000, scoped, tag = 'output window, operand 2, single buffered']
    %15 = vsyncpa [#allocation4], 0
    %16 = vsyncpa [#allocation6], 0
    // Predicated region
    $region2: #{tpu_custom_call.1} parent=1 // pred_check
      _
    $region3: #{tpu_custom_call.1} parent=1 // pred_check_branch
      %18 = sbr.rel (0) target = $region5
    $region4: #{tpu_custom_call.1} parent=1 // pred_region
      _
    $region5: #{tpu_custom_call.1} parent=1 // pred_fallthru
      _
    // Predicated region
    $region6: #{tpu_custom_call.1} parent=1 // pred_check
      _
    $region7: #{tpu_custom_call.1} parent=1 // pred_check_branch
      %20 = sbr.rel (0) target = $region9
    $region8: #{tpu_custom_call.1} parent=1 // pred_region
      _
    $region9: #{tpu_custom_call.1} parent=1 // pred_fallthru
      _
    // Predicated region
    $region10: #{tpu_custom_call.1} parent=1 // pred_check
      _
    $region11: #{tpu_custom_call.1} parent=1 // pred_check_branch
      %22 = sbr.rel (0) target = $region13
    $region12: #{tpu_custom_call.1} parent=1 // pred_region
      _
    $region13: #{tpu_custom_call.1} parent=1 // pred_fallthru
      _
    // Predicated region
    $region14: #{tpu_custom_call.1} parent=1 // pred_check
      _
    $region15: #{tpu_custom_call.1} parent=1 // pred_check_branch
      %24 = sbr.rel (0) target = $region17
    $region16: #{tpu_custom_call.1} parent=1 // pred_region
      _
    $region17: #{tpu_custom_call.1} parent=1 // pred_fallthru
      _
    // Predicated region
    $region18: #{tpu_custom_call.1} parent=1 // pred_check
      _
    $region19: #{tpu_custom_call.1} parent=1 // pred_check_branch
      %26 = sbr.rel (0) target = $region21
    $region20: #{tpu_custom_call.1} parent=1 // pred_region
      _
    $region21: #{tpu_custom_call.1} parent=1 // pred_fallthru
      _
    // Predicated region
    $region22: #{tpu_custom_call.1} parent=1 // pred_check
      _
    $region23: #{tpu_custom_call.1} parent=1 // pred_check_branch
      %28 = sbr.rel (0) target = $region25
    $region24: #{tpu_custom_call.1} parent=1 // pred_region
      _
    $region25: #{tpu_custom_call.1} parent=1 // pred_fallthru
      _
    // Predicated region
    $region26: #{tpu_custom_call.1} parent=1 // pred_check
      _
    $region27: #{tpu_custom_call.1} parent=1 // pred_check_branch
      %30 = sbr.rel (0) target = $region29
    $region28: #{tpu_custom_call.1} parent=1 // pred_region
      _
    $region29: #{tpu_custom_call.1} parent=1 // pred_fallthru
      _
    %v31 = vld [vmem:[%s0] sm:$0xff]
    %v32 = vld [vmem:[%s0 + $0x8] sm:$0xff]
    %v33 = vld [vmem:[%s0 + $0x10] sm:$0xff]
    %v34 = vld [vmem:[%s0 + $0x18] sm:$0xff]
    %v35 = vld [vmem:[%s0 + $0x20] sm:$0xff]
    %v36 = vld [vmem:[%s0 + $0x28] sm:$0xff]
    %v37 = vld [vmem:[%s0 + $0x30] sm:$0xff]
    %v38 = vld [vmem:[%s0 + $0x38] sm:$0xff]
    %v39 = vld [vmem:[%s1] sm:$0xff]
    %v40 = vld [vmem:[%s1 + $0x8] sm:$0xff]
    %v41 = vld [vmem:[%s1 + $0x10] sm:$0xff]
    %v42 = vld [vmem:[%s1 + $0x18] sm:$0xff]
    %v43 = vld [vmem:[%s1 + $0x20] sm:$0xff]
    %v44 = vld [vmem:[%s1 + $0x28] sm:$0xff]
    %v45 = vld [vmem:[%s1 + $0x30] sm:$0xff]
    %v46 = vld [vmem:[%s1 + $0x38] sm:$0xff]
    %v47 = vld [vmem:[%s2] sm:$0xff]
    %v48 = vld [vmem:[%s2 + $0x8] sm:$0xff]
    %v49 = vld [vmem:[%s2 + $0x10] sm:$0xff]
    %v50 = vld [vmem:[%s2 + $0x18] sm:$0xff]
    %v51 = vld [vmem:[%s2 + $0x20] sm:$0xff]
    %v52 = vld [vmem:[%s2 + $0x28] sm:$0xff]
    %v53 = vld [vmem:[%s2 + $0x30] sm:$0xff]
    %v54 = vld [vmem:[%s2 + $0x38] sm:$0xff]
    %v55 = vld [vmem:[%s4] sm:$0xff]
    %v56 = vld [vmem:[%s4 + $0x8] sm:$0xff]
    %v57 = vld [vmem:[%s4 + $0x10] sm:$0xff]
    %v58 = vld [vmem:[%s4 + $0x18] sm:$0xff]
    %v59 = vld [vmem:[%s4 + $0x20] sm:$0xff]
    %v60 = vld [vmem:[%s4 + $0x28] sm:$0xff]
    %v61 = vld [vmem:[%s4 + $0x30] sm:$0xff]
    %v62 = vld [vmem:[%s4 + $0x38] sm:$0xff]
    %v63 = vld [vmem:[%s4 + $0x40] sm:$0xff]
    %v64 = vld [vmem:[%s4 + $0x48] sm:$0xff]
    %v65 = vld [vmem:[%s4 + $0x50] sm:$0xff]
    %v66 = vld [vmem:[%s4 + $0x58] sm:$0xff]
    %v67 = vld [vmem:[%s4 + $0x60] sm:$0xff]
    %v68 = vld [vmem:[%s4 + $0x68] sm:$0xff]
    %v69 = vld [vmem:[%s4 + $0x70] sm:$0xff]
    %v70 = vld [vmem:[%s4 + $0x78] sm:$0xff]
    %v71 = vld [vmem:[%s4 + $0x80] sm:$0xff]
    %v72 = vld [vmem:[%s4 + $0x88] sm:$0xff]
    %v73 = vld [vmem:[%s4 + $0x90] sm:$0xff]
    %v74 = vld [vmem:[%s4 + $0x98] sm:$0xff]
    %v75 = vld [vmem:[%s4 + $0xa0] sm:$0xff]
    %76 = vst [vmem:[#allocation2] sm:$0xff] %v31
    %77 = vst [vmem:[#allocation2 + $0x8] sm:$0xff] %v32
    %78 = vst [vmem:[#allocation2 + $0x10] sm:$0xff] %v33
    %79 = vst [vmem:[#allocation2 + $0x18] sm:$0xff] %v34
    %80 = vst [vmem:[#allocation2 + $0x20] sm:$0xff] %v35
    %81 = vst [vmem:[#allocation2 + $0x28] sm:$0xff] %v36
    %82 = vst [vmem:[#allocation2 + $0x30] sm:$0xff] %v37
    %83 = vst [vmem:[#allocation2 + $0x38] sm:$0xff] %v38
    %84 = vst [vmem:[#allocation2 + $0x40] sm:$0xff] %v39
    %85 = vst [vmem:[#allocation2 + $0x48] sm:$0xff] %v40
    %86 = vst [vmem:[#allocation2 + $0x50] sm:$0xff] %v41
    %87 = vst [vmem:[#allocation2 + $0x58] sm:$0xff] %v42
    %88 = vst [vmem:[#allocation2 + $0x60] sm:$0xff] %v43
    %89 = vst [vmem:[#allocation2 + $0x68] sm:$0xff] %v44
    %90 = vst [vmem:[#allocation2 + $0x70] sm:$0xff] %v45
    %91 = vst [vmem:[#allocation2 + $0x78] sm:$0xff] %v46
    %v92 = vld [vmem:[%s3] sm:$0xff]
    %v93 = vld [vmem:[%s3 + $0x8] sm:$0xff]
    %v94 = vld [vmem:[%s3 + $0x10] sm:$0xff]
    %v95 = vld [vmem:[%s3 + $0x18] sm:$0xff]
    %v96 = vld [vmem:[%s3 + $0x20] sm:$0xff]
    %v97 = vld [vmem:[%s3 + $0x28] sm:$0xff]
    %v98 = vld [vmem:[%s3 + $0x30] sm:$0xff]
    %v99 = vld [vmem:[%s3 + $0x38] sm:$0xff]
    %v100 = vld [vmem:[%s3 + $0x40] sm:$0xff]
    %v101 = vld [vmem:[%s3 + $0x48] sm:$0xff]
    %v102 = vld [vmem:[%s3 + $0x50] sm:$0xff]
    %v103 = vld [vmem:[%s3 + $0x58] sm:$0xff]
    %v104 = vld [vmem:[%s3 + $0x60] sm:$0xff]
    %v105 = vld [vmem:[%s3 + $0x68] sm:$0xff]
    %v106 = vld [vmem:[%s3 + $0x70] sm:$0xff]
    %v107 = vld [vmem:[%s3 + $0x78] sm:$0xff]
    %v108 = vld [vmem:[#allocation2] sm:$0xff]
    %v109 = vld [vmem:[#allocation2 + $0x8] sm:$0xff]
    %v110 = vld [vmem:[#allocation2 + $0x10] sm:$0xff]
    %v111 = vld [vmem:[#allocation2 + $0x18] sm:$0xff]
    %v112 = vld [vmem:[#allocation2 + $0x20] sm:$0xff]
    %v113 = vld [vmem:[#allocation2 + $0x28] sm:$0xff]
    %v114 = vld [vmem:[#allocation2 + $0x30] sm:$0xff]
    %v115 = vld [vmem:[#allocation2 + $0x38] sm:$0xff]
    %v116 = vld [vmem:[#allocation2 + $0x40] sm:$0xff]
    %v117 = vld [vmem:[#allocation2 + $0x48] sm:$0xff]
    %v118 = vld [vmem:[#allocation2 + $0x50] sm:$0xff]
    %v119 = vld [vmem:[#allocation2 + $0x58] sm:$0xff]
    %v120 = vld [vmem:[#allocation2 + $0x60] sm:$0xff]
    %v121 = vld [vmem:[#allocation2 + $0x68] sm:$0xff]
    %v122 = vld [vmem:[#allocation2 + $0x70] sm:$0xff]
    %v123 = vld [vmem:[#allocation2 + $0x78] sm:$0xff]
    %125 = vset.pattern.permute.xlu0 0
    %126 = vperm.xlu0 %125, %v55
    %v127 = vpop.permute.xlu0 %126
    %130 = vset.pattern.permute.xlu0 0
    %131 = vperm.xlu0 %130, %v56
    %v132 = vpop.permute.xlu0 %131
    %135 = vset.pattern.permute.xlu0 0
    %136 = vperm.xlu0 %135, %v57
    %v137 = vpop.permute.xlu0 %136
    %140 = vset.pattern.permute.xlu0 0
    %141 = vperm.xlu0 %140, %v58
    %v142 = vpop.permute.xlu0 %141
    %145 = vset.pattern.permute.xlu0 0
    %146 = vperm.xlu0 %145, %v59
    %v147 = vpop.permute.xlu0 %146
    %150 = vset.pattern.permute.xlu0 0
    %151 = vperm.xlu0 %150, %v60
    %v152 = vpop.permute.xlu0 %151
    %155 = vset.pattern.permute.xlu0 0
    %156 = vperm.xlu0 %155, %v61
    %v157 = vpop.permute.xlu0 %156
    %160 = vset.pattern.permute.xlu0 0
    %161 = vperm.xlu0 %160, %v62
    %v162 = vpop.permute.xlu0 %161
    %165 = vset.pattern.permute.xlu0 0
    %166 = vperm.xlu0 %165, %v63
    %v167 = vpop.permute.xlu0 %166
    %170 = vset.pattern.permute.xlu0 0
    %171 = vperm.xlu0 %170, %v64
    %v172 = vpop.permute.xlu0 %171
    %175 = vset.pattern.permute.xlu0 0
    %176 = vperm.xlu0 %175, %v65
    %v177 = vpop.permute.xlu0 %176
    %180 = vset.pattern.permute.xlu0 0
    %181 = vperm.xlu0 %180, %v66
    %v182 = vpop.permute.xlu0 %181
    %185 = vset.pattern.permute.xlu0 0
    %186 = vperm.xlu0 %185, %v67
    %v187 = vpop.permute.xlu0 %186
    %190 = vset.pattern.permute.xlu0 0
    %191 = vperm.xlu0 %190, %v68
    %v192 = vpop.permute.xlu0 %191
    %195 = vset.pattern.permute.xlu0 0
    %196 = vperm.xlu0 %195, %v69
    %v197 = vpop.permute.xlu0 %196
    %200 = vset.pattern.permute.xlu0 0
    %201 = vperm.xlu0 %200, %v70
    %v202 = vpop.permute.xlu0 %201
    %vm204 = vcmask 523264
    %v206 = vsel %vm204, %v92, 0
    %v209 = vsel %vm204, %v93, 0
    %v212 = vsel %vm204, %v94, 0
    %v215 = vsel %vm204, %v95, 0
    %v218 = vsel %vm204, %v96, 0
    %v221 = vsel %vm204, %v97, 0
    %v224 = vsel %vm204, %v98, 0
    %v227 = vsel %vm204, %v99, 0
    %v230 = vsel %vm204, %v100, 0
    %v233 = vsel %vm204, %v101, 0
    %v236 = vsel %vm204, %v102, 0
    %v239 = vsel %vm204, %v103, 0
    %v242 = vsel %vm204, %v104, 0
    %v245 = vsel %vm204, %v105, 0
    %v248 = vsel %vm204, %v106, 0
    %v251 = vsel %vm204, %v107, 0
    %253 = vmatprep.subr.mxu0 %v109
    %254 = vmatpush1.msra.mxu0 %v108
    %255 = vmatprep.subr.mxu0 %v111
    %256 = vmatpush1.msra.mxu0 %v110
    %257 = vmatprep.subr.mxu0 %v113
    %258 = vmatpush1.msra.mxu0 %v112
    %259 = vmatprep.subr.mxu0 %v115
    %260 = vmatpush1.msra.mxu0 %v114
    %261 = vmatprep.subr.mxu0 %v117
    %262 = vmatpush1.msra.mxu0 %v116
    %263 = vmatprep.subr.mxu0 %v119
    %264 = vmatpush1.msra.mxu0 %v118
    %265 = vmatprep.subr.mxu0 %v121
    %266 = vmatpush1.msra.mxu0 %v120
    %267 = vmatprep.subr.mxu0 %v123
    %268 = vmatpush1.msra.mxu0 %v122
    %269 = vmatprep.subr.mxu0 0.0
    %270 = vmatpush1.msra.mxu0 0.0
    %271 = vmatprep.subr.mxu0 0.0
    %272 = vmatpush1.msra.mxu0 0.0
    %273 = vmatprep.subr.mxu0 0.0
    %274 = vmatpush1.msra.mxu0 0.0
    %275 = vmatprep.subr.mxu0 0.0
    %276 = vmatpush1.msra.mxu0 0.0
    %277 = vmatprep.subr.mxu0 0.0
    %278 = vmatpush1.msra.mxu0 0.0
    %279 = vmatprep.subr.mxu0 0.0
    %280 = vmatpush1.msra.mxu0 0.0
    %281 = vmatprep.subr.mxu0 0.0
    %282 = vmatpush1.msra.mxu0 0.0
    %283 = vmatprep.subr.mxu0 0.0
    %284 = vmatpush1.msra.mxu0 0.0
    %285 = vmatprep.subr.mxu0 0.0
    %286 = vmatpush1.msra.mxu0 0.0
    %287 = vmatprep.subr.mxu0 0.0
    %288 = vmatpush1.msra.mxu0 0.0
    %289 = vmatprep.subr.mxu0 0.0
    %290 = vmatpush1.msra.mxu0 0.0
    %291 = vmatprep.subr.mxu0 0.0
    %292 = vmatpush1.msra.mxu0 0.0
    %293 = vmatprep.subr.mxu0 0.0
    %294 = vmatpush1.msra.mxu0 0.0
    %295 = vmatprep.subr.mxu0 0.0
    %296 = vmatpush1.msra.mxu0 0.0
    %297 = vmatprep.subr.mxu0 0.0
    %298 = vmatpush1.msra.mxu0 0.0
    %299 = vmatprep.subr.mxu0 0.0
    %300 = vmatpush1.msra.mxu0 0.0
    %301 = vmatprep.subr.mxu0 0.0
    %302 = vmatpush1.msra.mxu0 0.0
    %303 = vmatprep.subr.mxu0 0.0
    %304 = vmatpush1.msra.mxu0 0.0
    %305 = vmatprep.subr.mxu0 0.0
    %306 = vmatpush1.msra.mxu0 0.0
    %307 = vmatprep.subr.mxu0 0.0
    %308 = vmatpush1.msra.mxu0 0.0
    %309 = vmatprep.subr.mxu0 0.0
    %310 = vmatpush1.msra.mxu0 0.0
    %311 = vmatprep.subr.mxu0 0.0
    %312 = vmatpush1.msra.mxu0 0.0
    %313 = vmatprep.subr.mxu0 0.0
    %314 = vmatpush1.msra.mxu0 0.0
    %315 = vmatprep.subr.mxu0 0.0
    %316 = vmatpush1.msra.mxu0 0.0
    %317 = vmatprep.mubr.f32.mxu0 0.0
    %318 = vmatmul.mubr.f32.gmra.mrb[0].mxu0 %v206
    %v319 = vpop.f32.mrb[0].mxu0
    %v320 = vadd.f32 %v127, %v319
    %v321 = vpop.f32.mrb[0].mxu0
    %v322 = vadd.f32 %v127, %v321
    %323 = vmatprep.mubr.f32.mxu0 0.0
    %324 = vmatmul.mubr.f32.gmra.mrb[0].mxu0 %v209
    %v325 = vpop.f32.mrb[0].mxu0
    %v326 = vadd.f32 %v132, %v325
    %v327 = vpop.f32.mrb[0].mxu0
    %v328 = vadd.f32 %v132, %v327
    %329 = vmatprep.mubr.f32.mxu0 0.0
    %330 = vmatmul.mubr.f32.gmra.mrb[0].mxu0 %v212
    %v331 = vpop.f32.mrb[0].mxu0
    %v332 = vadd.f32 %v137, %v331
    %v333 = vpop.f32.mrb[0].mxu0
    %v334 = vadd.f32 %v137, %v333
    %335 = vmatprep.mubr.f32.mxu0 0.0
    %336 = vmatmul.mubr.f32.gmra.mrb[0].mxu0 %v215
    %v337 = vpop.f32.mrb[0].mxu0
    %v338 = vadd.f32 %v142, %v337
    %v339 = vpop.f32.mrb[0].mxu0
    %v340 = vadd.f32 %v142, %v339
    %341 = vmatprep.mubr.f32.mxu0 0.0
    %342 = vmatmul.mubr.f32.gmra.mrb[0].mxu0 %v218
    %v343 = vpop.f32.mrb[0].mxu0
    %v344 = vadd.f32 %v147, %v343
    %v345 = vpop.f32.mrb[0].mxu0
    %v346 = vadd.f32 %v147, %v345
    %347 = vmatprep.mubr.f32.mxu0 0.0
    %348 = vmatmul.mubr.f32.gmra.mrb[0].mxu0 %v221
    %v349 = vpop.f32.mrb[0].mxu0
    %v350 = vadd.f32 %v152, %v349
    %v351 = vpop.f32.mrb[0].mxu0
    %v352 = vadd.f32 %v152, %v351
    %353 = vmatprep.mubr.f32.mxu0 0.0
    %354 = vmatmul.mubr.f32.gmra.mrb[0].mxu0 %v224
    %v355 = vpop.f32.mrb[0].mxu0
    %v356 = vadd.f32 %v157, %v355
    %v357 = vpop.f32.mrb[0].mxu0
    %v358 = vadd.f32 %v157, %v357
    %359 = vmatprep.mubr.f32.mxu0 0.0
    %360 = vmatmul.mubr.f32.gmra.mrb[0].mxu0 %v227
    %v361 = vpop.f32.mrb[0].mxu0
    %v362 = vadd.f32 %v162, %v361
    %v363 = vpop.f32.mrb[0].mxu0
    %v364 = vadd.f32 %v162, %v363
    %365 = vmatprep.mubr.f32.mxu0 0.0
    %366 = vmatmul.mubr.f32.gmra.mrb[0].mxu0 %v230
    %v367 = vpop.f32.mrb[0].mxu0
    %v368 = vadd.f32 %v167, %v367
    %v369 = vpop.f32.mrb[0].mxu0
    %v370 = vadd.f32 %v167, %v369
    %371 = vmatprep.mubr.f32.mxu0 0.0
    %372 = vmatmul.mubr.f32.gmra.mrb[0].mxu0 %v233
    %v373 = vpop.f32.mrb[0].mxu0
    %v374 = vadd.f32 %v172, %v373
    %v375 = vpop.f32.mrb[0].mxu0
    %v376 = vadd.f32 %v172, %v375
    %377 = vmatprep.mubr.f32.mxu0 0.0
    %378 = vmatmul.mubr.f32.gmra.mrb[0].mxu0 %v236
    %v379 = vpop.f32.mrb[0].mxu0
    %v380 = vadd.f32 %v177, %v379
    %v381 = vpop.f32.mrb[0].mxu0
    %v382 = vadd.f32 %v177, %v381
    %383 = vmatprep.mubr.f32.mxu0 0.0
    %384 = vmatmul.mubr.f32.gmra.mrb[0].mxu0 %v239
    %v385 = vpop.f32.mrb[0].mxu0
    %v386 = vadd.f32 %v182, %v385
    %v387 = vpop.f32.mrb[0].mxu0
    %v388 = vadd.f32 %v182, %v387
    %389 = vmatprep.mubr.f32.mxu0 0.0
    %390 = vmatmul.mubr.f32.gmra.mrb[0].mxu0 %v242
    %v391 = vpop.f32.mrb[0].mxu0
    %v392 = vadd.f32 %v187, %v391
    %v393 = vpop.f32.mrb[0].mxu0
    %v394 = vadd.f32 %v187, %v393
    %395 = vmatprep.mubr.f32.mxu0 0.0
    %396 = vmatmul.mubr.f32.gmra.mrb[0].mxu0 %v245
    %v397 = vpop.f32.mrb[0].mxu0
    %v398 = vadd.f32 %v192, %v397
    %v399 = vpop.f32.mrb[0].mxu0
    %v400 = vadd.f32 %v192, %v399
    %401 = vmatprep.mubr.f32.mxu0 0.0
    %402 = vmatmul.mubr.f32.gmra.mrb[0].mxu0 %v248
    %v403 = vpop.f32.mrb[0].mxu0
    %v404 = vadd.f32 %v197, %v403
    %v405 = vpop.f32.mrb[0].mxu0
    %v406 = vadd.f32 %v197, %v405
    %407 = vmatprep.mubr.f32.mxu0 0.0
    %408 = vmatmul.mubr.f32.gmra.mrb[0].mxu0 %v251
    %v409 = vpop.f32.mrb[0].mxu0
    %v410 = vadd.f32 %v202, %v409
    %v411 = vpop.f32.mrb[0].mxu0
    %v412 = vadd.f32 %v202, %v411
    %413 = vdwg.mxu0
    %v414 = vmul.f32 %v320, 0.5
    %v415 = vmul.f32 %v322, 0.5
    %v416 = vmul.f32 %v326, 0.5
    %v417 = vmul.f32 %v328, 0.5
    %v418 = vmul.f32 %v332, 0.5
    %v419 = vmul.f32 %v334, 0.5
    %v420 = vmul.f32 %v338, 0.5
    %v421 = vmul.f32 %v340, 0.5
    %v422 = vtanh.pop %v414
    %v423 = vtanh.pop %v415
    %v424 = vtanh.pop %v416
    %v425 = vtanh.pop %v417
    %v426 = vtanh.pop %v418
    %v427 = vtanh.pop %v419
    %v428 = vtanh.pop %v420
    %v429 = vtanh.pop %v421
    %v430 = vadd.f32 %v422, 1.0
    %v431 = vadd.f32 %v423, 1.0
    %v432 = vadd.f32 %v424, 1.0
    %v433 = vadd.f32 %v425, 1.0
    %v434 = vadd.f32 %v426, 1.0
    %v435 = vadd.f32 %v427, 1.0
    %v436 = vadd.f32 %v428, 1.0
    %v437 = vadd.f32 %v429, 1.0
    %v438 = vmul.f32 %v430, 0.5
    %v439 = vmul.f32 %v431, 0.5
    %v440 = vmul.f32 %v432, 0.5
    %v441 = vmul.f32 %v433, 0.5
    %v442 = vmul.f32 %v434, 0.5
    %v443 = vmul.f32 %v435, 0.5
    %v444 = vmul.f32 %v436, 0.5
    %v445 = vmul.f32 %v437, 0.5
    %v446 = vmul.f32 %v344, 0.5
    %v447 = vmul.f32 %v346, 0.5
    %v448 = vmul.f32 %v350, 0.5
    %v449 = vmul.f32 %v352, 0.5
    %v450 = vmul.f32 %v356, 0.5
    %v451 = vmul.f32 %v358, 0.5
    %v452 = vmul.f32 %v362, 0.5
    %v453 = vmul.f32 %v364, 0.5
    %v454 = vtanh.pop %v446
    %v455 = vtanh.pop %v447
    %v456 = vtanh.pop %v448
    %v457 = vtanh.pop %v449
    %v458 = vtanh.pop %v450
    %v459 = vtanh.pop %v451
    %v460 = vtanh.pop %v452
    %v461 = vtanh.pop %v453
    %v462 = vadd.f32 %v454, 1.0
    %v463 = vadd.f32 %v455, 1.0
    %v464 = vadd.f32 %v456, 1.0
    %v465 = vadd.f32 %v457, 1.0
    %v466 = vadd.f32 %v458, 1.0
    %v467 = vadd.f32 %v459, 1.0
    %v468 = vadd.f32 %v460, 1.0
    %v469 = vadd.f32 %v461, 1.0
    %v470 = vmul.f32 %v462, 0.5
    %v471 = vmul.f32 %v463, 0.5
    %v472 = vmul.f32 %v464, 0.5
    %v473 = vmul.f32 %v465, 0.5
    %v474 = vmul.f32 %v466, 0.5
    %v475 = vmul.f32 %v467, 0.5
    %v476 = vmul.f32 %v468, 0.5
    %v477 = vmul.f32 %v469, 0.5
    %v478 = vtanh.pop %v368
    %v479 = vtanh.pop %v370
    %v480 = vtanh.pop %v374
    %v481 = vtanh.pop %v376
    %v482 = vtanh.pop %v380
    %v483 = vtanh.pop %v382
    %v484 = vtanh.pop %v386
    %v485 = vtanh.pop %v388
    %v486 = vmul.f32 %v392, 0.5
    %v487 = vmul.f32 %v394, 0.5
    %v488 = vmul.f32 %v398, 0.5
    %v489 = vmul.f32 %v400, 0.5
    %v490 = vmul.f32 %v404, 0.5
    %v491 = vmul.f32 %v406, 0.5
    %v492 = vmul.f32 %v410, 0.5
    %v493 = vmul.f32 %v412, 0.5
    %v494 = vtanh.pop %v486
    %v495 = vtanh.pop %v487
    %v496 = vtanh.pop %v488
    %v497 = vtanh.pop %v489
    %v498 = vtanh.pop %v490
    %v499 = vtanh.pop %v491
    %v500 = vtanh.pop %v492
    %v501 = vtanh.pop %v493
    %v502 = vadd.f32 %v494, 1.0
    %v503 = vadd.f32 %v495, 1.0
    %v504 = vadd.f32 %v496, 1.0
    %v505 = vadd.f32 %v497, 1.0
    %v506 = vadd.f32 %v498, 1.0
    %v507 = vadd.f32 %v499, 1.0
    %v508 = vadd.f32 %v500, 1.0
    %v509 = vadd.f32 %v501, 1.0
    %v510 = vmul.f32 %v502, 0.5
    %v511 = vmul.f32 %v503, 0.5
    %v512 = vmul.f32 %v504, 0.5
    %v513 = vmul.f32 %v505, 0.5
    %v514 = vmul.f32 %v506, 0.5
    %v515 = vmul.f32 %v507, 0.5
    %v516 = vmul.f32 %v508, 0.5
    %v517 = vmul.f32 %v509, 0.5
    %v518 = vmul.f32 %v470, %v47
    %v519 = vmul.f32 %v471, %v48
    %v520 = vmul.f32 %v472, %v49
    %v521 = vmul.f32 %v473, %v50
    %v522 = vmul.f32 %v474, %v51
    %v523 = vmul.f32 %v475, %v52
    %v524 = vmul.f32 %v476, %v53
    %v525 = vmul.f32 %v477, %v54
    %v526 = vmul.f32 %v438, %v478
    %v527 = vmul.f32 %v439, %v479
    %v528 = vmul.f32 %v440, %v480
    %v529 = vmul.f32 %v441, %v481
    %v530 = vmul.f32 %v442, %v482
    %v531 = vmul.f32 %v443, %v483
    %v532 = vmul.f32 %v444, %v484
    %v533 = vmul.f32 %v445, %v485
    %v534 = vadd.f32 %v518, %v526
    %v535 = vadd.f32 %v519, %v527
    %v536 = vadd.f32 %v520, %v528
    %v537 = vadd.f32 %v521, %v529
    %v538 = vadd.f32 %v522, %v530
    %v539 = vadd.f32 %v523, %v531
    %v540 = vadd.f32 %v524, %v532
    %v541 = vadd.f32 %v525, %v533
    %v542 = vtanh.pop %v534
    %v543 = vtanh.pop %v535
    %v544 = vtanh.pop %v536
    %v545 = vtanh.pop %v537
    %v546 = vtanh.pop %v538
    %v547 = vtanh.pop %v539
    %v548 = vtanh.pop %v540
    %v549 = vtanh.pop %v541
    %v550 = vmul.f32 %v510, %v542
    %v551 = vmul.f32 %v511, %v543
    %v552 = vmul.f32 %v512, %v544
    %v553 = vmul.f32 %v513, %v545
    %v554 = vmul.f32 %v514, %v546
    %v555 = vmul.f32 %v515, %v547
    %v556 = vmul.f32 %v516, %v548
    %v557 = vmul.f32 %v517, %v549
    %v558 = vld [vmem:[%s5] sm:$0xff]
    %v559 = vld [vmem:[%s5 + $0x8] sm:$0xff]
    %v560 = vld [vmem:[%s5 + $0x10] sm:$0xff]
    %v561 = vld [vmem:[%s5 + $0x18] sm:$0xff]
    %563 = vset.pattern.permute.xlu0 0
    %564 = vperm.xlu0 %563, %v71
    %v565 = vpop.permute.xlu0 %564
    %568 = vset.pattern.permute.xlu0 0
    %569 = vperm.xlu0 %568, %v72
    %v570 = vpop.permute.xlu0 %569
    %573 = vset.pattern.permute.xlu0 0
    %574 = vperm.xlu0 %573, %v73
    %v575 = vpop.permute.xlu0 %574
    %578 = vset.pattern.permute.xlu0 0
    %579 = vperm.xlu0 %578, %v74
    %v580 = vpop.permute.xlu0 %579
    %vm582 = vcmask 261120
    %v584 = vsel %vm582, %v558, 0
    %v587 = vsel %vm582, %v559, 0
    %v590 = vsel %vm582, %v560, 0
    %v593 = vsel %vm582, %v561, 0
    %595 = vmatprep.subr.mxu0 %v551
    %596 = vmatpush1.msra.mxu0 %v550
    %597 = vmatprep.subr.mxu0 %v553
    %598 = vmatpush1.msra.mxu0 %v552
    %599 = vmatprep.subr.mxu0 %v555
    %600 = vmatpush1.msra.mxu0 %v554
    %601 = vmatprep.subr.mxu0 %v557
    %602 = vmatpush1.msra.mxu0 %v556
    %603 = vmatprep.subr.mxu0 0.0
    %604 = vmatpush1.msra.mxu0 0.0
    %605 = vmatprep.subr.mxu0 0.0
    %606 = vmatpush1.msra.mxu0 0.0
    %607 = vmatprep.subr.mxu0 0.0
    %608 = vmatpush1.msra.mxu0 0.0
    %609 = vmatprep.subr.mxu0 0.0
    %610 = vmatpush1.msra.mxu0 0.0
    %611 = vmatprep.subr.mxu0 0.0
    %612 = vmatpush1.msra.mxu0 0.0
    %613 = vmatprep.subr.mxu0 0.0
    %614 = vmatpush1.msra.mxu0 0.0
    %615 = vmatprep.subr.mxu0 0.0
    %616 = vmatpush1.msra.mxu0 0.0
    %617 = vmatprep.subr.mxu0 0.0
    %618 = vmatpush1.msra.mxu0 0.0
    %619 = vmatprep.subr.mxu0 0.0
    %620 = vmatpush1.msra.mxu0 0.0
    %621 = vmatprep.subr.mxu0 0.0
    %622 = vmatpush1.msra.mxu0 0.0
    %623 = vmatprep.subr.mxu0 0.0
    %624 = vmatpush1.msra.mxu0 0.0
    %625 = vmatprep.subr.mxu0 0.0
    %626 = vmatpush1.msra.mxu0 0.0
    %627 = vmatprep.subr.mxu0 0.0
    %628 = vmatpush1.msra.mxu0 0.0
    %629 = vmatprep.subr.mxu0 0.0
    %630 = vmatpush1.msra.mxu0 0.0
    %631 = vmatprep.subr.mxu0 0.0
    %632 = vmatpush1.msra.mxu0 0.0
    %633 = vmatprep.subr.mxu0 0.0
    %634 = vmatpush1.msra.mxu0 0.0
    %635 = vmatprep.subr.mxu0 0.0
    %636 = vmatpush1.msra.mxu0 0.0
    %637 = vmatprep.subr.mxu0 0.0
    %638 = vmatpush1.msra.mxu0 0.0
    %639 = vmatprep.subr.mxu0 0.0
    %640 = vmatpush1.msra.mxu0 0.0
    %641 = vmatprep.subr.mxu0 0.0
    %642 = vmatpush1.msra.mxu0 0.0
    %643 = vmatprep.subr.mxu0 0.0
    %644 = vmatpush1.msra.mxu0 0.0
    %645 = vmatprep.subr.mxu0 0.0
    %646 = vmatpush1.msra.mxu0 0.0
    %647 = vmatprep.subr.mxu0 0.0
    %648 = vmatpush1.msra.mxu0 0.0
    %649 = vmatprep.subr.mxu0 0.0
    %650 = vmatpush1.msra.mxu0 0.0
    %651 = vmatprep.subr.mxu0 0.0
    %652 = vmatpush1.msra.mxu0 0.0
    %653 = vmatprep.subr.mxu0 0.0
    %654 = vmatpush1.msra.mxu0 0.0
    %655 = vmatprep.subr.mxu0 0.0
    %656 = vmatpush1.msra.mxu0 0.0
    %657 = vmatprep.subr.mxu0 0.0
    %658 = vmatpush1.msra.mxu0 0.0
    %659 = vmatprep.mubr.f32.mxu0 0.0
    %660 = vmatmul.mubr.f32.gmra.mrb[0].mxu0 %v584
    %v661 = vpop.f32.mrb[0].mxu0
    %v662 = vadd.f32 %v565, %v661
    %v663 = vpop.f32.mrb[0].mxu0
    %v664 = vadd.f32 %v565, %v663
    %665 = vmatprep.mubr.f32.mxu0 0.0
    %666 = vmatmul.mubr.f32.gmra.mrb[0].mxu0 %v587
    %v667 = vpop.f32.mrb[0].mxu0
    %v668 = vadd.f32 %v570, %v667
    %v669 = vpop.f32.mrb[0].mxu0
    %v670 = vadd.f32 %v570, %v669
    %671 = vmatprep.mubr.f32.mxu0 0.0
    %672 = vmatmul.mubr.f32.gmra.mrb[0].mxu0 %v590
    %v673 = vpop.f32.mrb[0].mxu0
    %v674 = vadd.f32 %v575, %v673
    %v675 = vpop.f32.mrb[0].mxu0
    %v676 = vadd.f32 %v575, %v675
    %677 = vmatprep.mubr.f32.mxu0 0.0
    %678 = vmatmul.mubr.f32.gmra.mrb[0].mxu0 %v593
    %v679 = vpop.f32.mrb[0].mxu0
    %v680 = vadd.f32 %v580, %v679
    %v681 = vpop.f32.mrb[0].mxu0
    %v682 = vadd.f32 %v580, %v681
    %683 = vdwg.mxu0
    %vm684 = vcmp.ge.f32.partialorder %v662, 0.0
    %vm685 = vcmp.ge.f32.partialorder %v664, 0.0
    %vm686 = vcmp.ge.f32.partialorder %v668, 0.0
    %vm687 = vcmp.ge.f32.partialorder %v670, 0.0
    %vm688 = vcmp.ge.f32.partialorder %v674, 0.0
    %vm689 = vcmp.ge.f32.partialorder %v676, 0.0
    %vm690 = vcmp.ge.f32.partialorder %v680, 0.0
    %vm691 = vcmp.ge.f32.partialorder %v682, 0.0
    %v692 = vmul.f32 %v662, 0.01
    %v693 = vmul.f32 %v664, 0.01
    %v694 = vmul.f32 %v668, 0.01
    %v695 = vmul.f32 %v670, 0.01
    %v696 = vmul.f32 %v674, 0.01
    %v697 = vmul.f32 %v676, 0.01
    %v698 = vmul.f32 %v680, 0.01
    %v699 = vmul.f32 %v682, 0.01
    %v700 = vsel %vm684, %v662, %v692
    %v701 = vsel %vm685, %v664, %v693
    %v702 = vsel %vm686, %v668, %v694
    %v703 = vsel %vm687, %v670, %v695
    %v704 = vsel %vm688, %v674, %v696
    %v705 = vsel %vm689, %v676, %v697
    %v706 = vsel %vm690, %v680, %v698
    %v707 = vsel %vm691, %v682, %v699
    %v708 = vld [vmem:[%s6] sm:$0xff]
    %710 = vset.pattern.permute.xlu0 0
    %711 = vperm.xlu0 %710, %v75
    %v712 = vpop.permute.xlu0 %711
    %v715 = vsel %vm582, %v708, 0
    %717 = vmatprep.subr.mxu0 %v701
    %718 = vmatpush1.msra.mxu0 %v700
    %719 = vmatprep.subr.mxu0 %v703
    %720 = vmatpush1.msra.mxu0 %v702
    %721 = vmatprep.subr.mxu0 %v705
    %722 = vmatpush1.msra.mxu0 %v704
    %723 = vmatprep.subr.mxu0 %v707
    %724 = vmatpush1.msra.mxu0 %v706
    %725 = vmatprep.subr.mxu0 0.0
    %726 = vmatpush1.msra.mxu0 0.0
    %727 = vmatprep.subr.mxu0 0.0
    %728 = vmatpush1.msra.mxu0 0.0
    %729 = vmatprep.subr.mxu0 0.0
    %730 = vmatpush1.msra.mxu0 0.0
    %731 = vmatprep.subr.mxu0 0.0
    %732 = vmatpush1.msra.mxu0 0.0
    %733 = vmatprep.subr.mxu0 0.0
    %734 = vmatpush1.msra.mxu0 0.0
    %735 = vmatprep.subr.mxu0 0.0
    %736 = vmatpush1.msra.mxu0 0.0
    %737 = vmatprep.subr.mxu0 0.0
    %738 = vmatpush1.msra.mxu0 0.0
    %739 = vmatprep.subr.mxu0 0.0
    %740 = vmatpush1.msra.mxu0 0.0
    %741 = vmatprep.subr.mxu0 0.0
    %742 = vmatpush1.msra.mxu0 0.0
    %743 = vmatprep.subr.mxu0 0.0
    %744 = vmatpush1.msra.mxu0 0.0
    %745 = vmatprep.subr.mxu0 0.0
    %746 = vmatpush1.msra.mxu0 0.0
    %747 = vmatprep.subr.mxu0 0.0
    %748 = vmatpush1.msra.mxu0 0.0
    %749 = vmatprep.subr.mxu0 0.0
    %750 = vmatpush1.msra.mxu0 0.0
    %751 = vmatprep.subr.mxu0 0.0
    %752 = vmatpush1.msra.mxu0 0.0
    %753 = vmatprep.subr.mxu0 0.0
    %754 = vmatpush1.msra.mxu0 0.0
    %755 = vmatprep.subr.mxu0 0.0
    %756 = vmatpush1.msra.mxu0 0.0
    %757 = vmatprep.subr.mxu0 0.0
    %758 = vmatpush1.msra.mxu0 0.0
    %759 = vmatprep.subr.mxu0 0.0
    %760 = vmatpush1.msra.mxu0 0.0
    %761 = vmatprep.subr.mxu0 0.0
    %762 = vmatpush1.msra.mxu0 0.0
    %763 = vmatprep.subr.mxu0 0.0
    %764 = vmatpush1.msra.mxu0 0.0
    %765 = vmatprep.subr.mxu0 0.0
    %766 = vmatpush1.msra.mxu0 0.0
    %767 = vmatprep.subr.mxu0 0.0
    %768 = vmatpush1.msra.mxu0 0.0
    %769 = vmatprep.subr.mxu0 0.0
    %770 = vmatpush1.msra.mxu0 0.0
    %771 = vmatprep.subr.mxu0 0.0
    %772 = vmatpush1.msra.mxu0 0.0
    %773 = vmatprep.subr.mxu0 0.0
    %774 = vmatpush1.msra.mxu0 0.0
    %775 = vmatprep.subr.mxu0 0.0
    %776 = vmatpush1.msra.mxu0 0.0
    %777 = vmatprep.subr.mxu0 0.0
    %778 = vmatpush1.msra.mxu0 0.0
    %779 = vmatprep.subr.mxu0 0.0
    %780 = vmatpush1.msra.mxu0 0.0
    %781 = vmatprep.mubr.f32.mxu0 0.0
    %782 = vmatmul.mubr.f32.gmra.mrb[0].mxu0 %v715
    %v783 = vpop.f32.mrb[0].mxu0
    %v784 = vadd.f32 %v712, %v783
    %v785 = vpop.f32.mrb[0].mxu0
    %v786 = vadd.f32 %v712, %v785
    %787 = vdwg.mxu0
    %788 = vst [vmem:[#allocation3] sm:$0xff] %v784
    %789 = vst [vmem:[#allocation3 + $0x8] sm:$0xff] %v786
    %790 = vst [vmem:[#allocation5] sm:$0xff] %v550
    %791 = vst [vmem:[#allocation5 + $0x8] sm:$0xff] %v551
    %792 = vst [vmem:[#allocation5 + $0x10] sm:$0xff] %v552
    %793 = vst [vmem:[#allocation5 + $0x18] sm:$0xff] %v553
    %794 = vst [vmem:[#allocation5 + $0x20] sm:$0xff] %v554
    %795 = vst [vmem:[#allocation5 + $0x28] sm:$0xff] %v555
    %796 = vst [vmem:[#allocation5 + $0x30] sm:$0xff] %v556
    %797 = vst [vmem:[#allocation5 + $0x38] sm:$0xff] %v557
    %798 = vst [vmem:[#allocation7] sm:$0xff] %v534
    %799 = vst [vmem:[#allocation7 + $0x8] sm:$0xff] %v535
    %800 = vst [vmem:[#allocation7 + $0x10] sm:$0xff] %v536
    %801 = vst [vmem:[#allocation7 + $0x18] sm:$0xff] %v537
    %802 = vst [vmem:[#allocation7 + $0x20] sm:$0xff] %v538
    %803 = vst [vmem:[#allocation7 + $0x28] sm:$0xff] %v539
    %804 = vst [vmem:[#allocation7 + $0x30] sm:$0xff] %v540
    %805 = vst [vmem:[#allocation7 + $0x38] sm:$0xff] %v541
    // Predicated region
    $region30: #{tpu_custom_call.1} parent=1 // pred_check
      _
    $region31: #{tpu_custom_call.1} parent=1 // pred_check_branch
      %807 = sbr.rel (0) target = $region33
    $region32: #{tpu_custom_call.1} parent=1 // pred_region
      %s809 = ssub.s32 256, 256
      %810 = vsyncadd [#allocation4], %s809
      %s812 = sshll.u32 [#allocation3], 4
      %s813 = int_to_ptr.vmem [resolvable:$true] %s812
      %815 = dma.vmem_to_hbm [thread:$0]  %s813, 256, %s7, [#allocation4]
    $region33: #{tpu_custom_call.1} parent=1 // pred_fallthru
      _
    // Predicated region
    $region34: #{tpu_custom_call.1} parent=1 // pred_check
      _
    $region35: #{tpu_custom_call.1} parent=1 // pred_check_branch
      %817 = sbr.rel (0) target = $region37
    $region36: #{tpu_custom_call.1} parent=1 // pred_region
      %s819 = ssub.s32 1024, 1024
      %820 = vsyncadd [#allocation6], %s819
      %s821 = sshll.u32 [#allocation5], 4
      %s822 = int_to_ptr.vmem [resolvable:$true] %s821
      %827 = dma.vmem_to_hbm [thread:$0]  %s822, 1024, %s8, [#allocation6], 256, 256, 16
    $region37: #{tpu_custom_call.1} parent=1 // pred_fallthru
      _
    // Predicated region
    $region38: #{tpu_custom_call.1} parent=1 // pred_check
      _
    $region39: #{tpu_custom_call.1} parent=1 // pred_check_branch
      %829 = sbr.rel (0) target = $region41
    $region40: #{tpu_custom_call.1} parent=1 // pred_region
      %s831 = ssub.s32 1024, 1024
      %832 = vsyncadd [#allocation6], %s831
      %s833 = sshll.u32 [#allocation7], 4
      %s834 = int_to_ptr.vmem [resolvable:$true] %s833
      %839 = dma.vmem_to_hbm [thread:$0]  %s834, 1024, %s9, [#allocation6], 256, 256, 16
    $region41: #{tpu_custom_call.1} parent=1 // pred_fallthru
      _
    // Predicated region
    $region42: #{tpu_custom_call.1} parent=1 // pred_check
      _
    $region43: #{tpu_custom_call.1} parent=1 // pred_check_branch
      %841 = sbr.rel (0) target = $region45
    $region44: #{tpu_custom_call.1} parent=1 // pred_region
      %842 = dma.done [#allocation4], 256
    $region45: #{tpu_custom_call.1} parent=1 // pred_fallthru
      _
    // Predicated region
    $region46: #{tpu_custom_call.1} parent=1 // pred_check
      _
    $region47: #{tpu_custom_call.1} parent=1 // pred_check_branch
      %844 = sbr.rel (0) target = $region49
    $region48: #{tpu_custom_call.1} parent=1 // pred_region
      %845 = dma.done [#allocation6], 1024
    $region49: #{tpu_custom_call.1} parent=1 // pred_fallthru
      _
    // Predicated region
    $region50: #{tpu_custom_call.1} parent=1 // pred_check
      _
    $region51: #{tpu_custom_call.1} parent=1 // pred_check_branch
      %847 = sbr.rel (0) target = $region53
    $region52: #{tpu_custom_call.1} parent=1 // pred_region
      %848 = dma.done [#allocation6], 1024
    $region53: #{tpu_custom_call.1} parent=1 // pred_fallthru
      _
    %849 = vsyncpa [#allocation4], 1
    %850 = vsyncpa [#allocation6], 1

</llo_original>
